<compile_context>
chip_gen: v6e
topology: v6e:2x2x1
jax: 0.10.0
libtpu: 0.0.40
codegen_flags: <defaults>
</compile_context>

<pallas_src>
import functools

import jax
import jax.numpy as jnp
from jax import lax
from jax.experimental import pallas as pl
from jax.experimental.pallas import tpu as pltpu


# ----------------------------------------------------------------------------
# Hardware / block-size helpers
# ----------------------------------------------------------------------------
def _vmem_capacity_bytes():
    try:
        return int(pltpu.get_tpu_info().vmem_capacity_bytes)
    except Exception:
        return 128 << 20  # conservative default (v5e/v6e physical)


def _is_v7x():
    try:
        kind = jax.devices()[0].device_kind.lower()
        return ("v7" in kind) or ("7x" in kind)
    except Exception:
        return False


def _pick_block_b(total_b, s, h, itemsize, budget_bytes=None):
    """Pick a batch tile TB dividing total_b.

    Only tiles that are multiples of 8 (sublane-dense blocks / stores) or the
    full batch are considered.  Budget assumes two token streams (x1, x2),
    each double-buffered.  Capacity-aware: ~24 MiB of x-tile budget on
    128 MiB chips (v5e/v6e), ~12 MiB on 64 MiB chips (v7x).
    """
    if budget_bytes is None:
        cap = _vmem_capacity_bytes()
        budget_bytes = min(24 << 20, max(cap // 5, 4 << 20))
    cand = [d for d in range(1, total_b + 1)
            if total_b % d == 0 and (d % 8 == 0 or d == total_b)]
    fits = [d for d in cand if 4 * d * s * h * itemsize <= budget_bytes]
    if not fits:
        fits = [min(cand)]
    # Prefer filling the MXU M dimension (TB*S >= 256 rows), then largest.
    return max(fits, key=lambda d: (d * s >= 256, d))


def _vmem_limit_bytes(tb, s, h, x_itemsize, w_itemsize, extra_resident_bytes):
    est = (4 * tb * s * h * x_itemsize      # two views, double-buffered
           + 2 * h * h * w_itemsize         # weight block
           + 4 * h * 4                      # bias
           + extra_resident_bytes           # embedding scratch (fused path)
           + 4 * tb * s * h                 # f32 hidden temporaries (rough)
           + 256 * 1024)                    # outputs / slack
    cap = _vmem_capacity_bytes()
    return int(min(max(2 * est, 16 << 20), int(0.75 * cap)))


# ----------------------------------------------------------------------------
# Shared math
# ----------------------------------------------------------------------------
def _encode_block(x2d, w, b, seq):
    """x2d: (tb*seq, H) tokens, w: (H, H) same dtype, b: (1, H) f32.

    One MXU matmul with f32 accumulation; bias-add / tanh / mean stay f32
    (portable to v5e which has no bf16 VPU/EUP).  Returns (tb, H) f32.
    """
    hidden = jnp.tanh(jnp.dot(x2d, w, preferred_element_type=jnp.float32) + b)
    rows, h = hidden.shape
    return jnp.mean(hidden.reshape(rows // seq, seq, h), axis=1)


def _simcse_head(labels, e1, e2, batch, inv_temperature):
    """labels: (1, B) i32, e1/e2: (B, H) f32 -> (loss (1,1), scores (1,B)).

    Computed in transposed orientation so both the labels input and the
    positive-score output are lane-dense (1, B).
    """
    eps = 1e-8
    inv1 = lax.rsqrt(jnp.maximum(jnp.sum(e1 * e1, axis=1, keepdims=True),
                                 eps * eps))
    inv2 = lax.rsqrt(jnp.maximum(jnp.sum(e2 * e2, axis=1, keepdims=True),
                                 eps * eps))
    e1n = e1 * inv1
    e2n = e2 * inv2

    # sim_t[j, i] = <e2n[j], e1n[i]> = cosine_sim(e1[i], e2[j]) = sim[i, j]
    sim_t = lax.dot_general(e2n, e1n, (((1,), (1,)), ((), ())),
                            preferred_element_type=jnp.float32)  # (B, B)

    row_iota = lax.broadcasted_iota(jnp.int32, (batch, batch), 0)
    pos_mask = row_iota == labels          # pos_mask[j, i] = (j == labels[i])

    logits_t = sim_t * inv_temperature
    col_max = jnp.max(logits_t, axis=0, keepdims=True)             # (1, B)
    lse = jnp.log(jnp.sum(jnp.exp(logits_t - col_max),
                          axis=0, keepdims=True)) + col_max        # (1, B)
    pos_logit = jnp.sum(jnp.where(pos_mask, logits_t, 0.0),
                        axis=0, keepdims=True)                     # (1, B)
    loss = jnp.mean(lse - pos_logit).reshape(1, 1)
    scores = jnp.sum(jnp.where(pos_mask, sim_t, 0.0),
                     axis=0, keepdims=True)                        # (1, B)
    return loss, scores


# ----------------------------------------------------------------------------
# Kernels
# ----------------------------------------------------------------------------
def _fused_kernel(labels_ref, x1_ref, x2_ref, w_ref, b_ref,
                  loss_ref, scores_ref, e1_sc, e2_sc,
                  *, seq, tb, batch, inv_temperature):
    """Encoder for both views (one block each per grid step) + fused head."""
    step = pl.program_id(0)
    start = step * tb
    if tb % 8 == 0:
        start = pl.multiple_of(start, 8)

    w = w_ref[...]
    bias = b_ref[...]
    e1_sc[pl.ds(start, tb), :] = _encode_block(x1_ref[...], w, bias, seq)
    e2_sc[pl.ds(start, tb), :] = _encode_block(x2_ref[...], w, bias, seq)

    @pl.when(step == pl.num_programs(0) - 1)
    def _():
        loss, scores = _simcse_head(labels_ref[...], e1_sc[...], e2_sc[...],
                                    batch, inv_temperature)
        loss_ref[...] = loss
        scores_ref[...] = scores


def _encode2_kernel(x1_ref, x2_ref, w_ref, b_ref, e1_ref, e2_ref, *, seq):
    """Encode one block of both views; embeddings go to HBM (v7x split path)."""
    w = w_ref[...]
    bias = b_ref[...]
    e1_ref[...] = _encode_block(x1_ref[...], w, bias, seq).astype(e1_ref.dtype)
    e2_ref[...] = _encode_block(x2_ref[...], w, bias, seq).astype(e2_ref.dtype)


def _head_kernel(labels_ref, e1_ref, e2_ref, loss_ref, scores_ref,
                 *, batch, inv_temperature):
    loss, scores = _simcse_head(labels_ref[...], e1_ref[...], e2_ref[...],
                                batch, inv_temperature)
    loss_ref[...] = loss
    scores_ref[...] = scores


def _encode_kernel(x_ref, w_ref, b_ref, out_ref, *, seq):
    out_ref[...] = _encode_block(x_ref[...], w_ref[...], b_ref[...],
                                 seq).astype(out_ref.dtype)


# ----------------------------------------------------------------------------
# Wrappers
# ----------------------------------------------------------------------------
def simcse_forward(x1, x2, labels, w, b, temperature=0.05, fuse_head=None):
    """Training branch: two views -> (loss scalar, positive scores (B,)).

    x1, x2: (B, S, H) token embeddings (bf16 recommended — halves HBM traffic).
    Compute dtype for the MXU contraction = x dtype; accumulation is f32.
    """
    B, S, H = x1.shape
    assert x2.shape == (B, S, H)
    compute_dtype = x1.dtype
    w_c = w.astype(compute_dtype)                      # cast once, not per step
    b_row = jnp.asarray(b, jnp.float32).reshape(1, H)
    labels_row = labels.astype(jnp.int32).reshape(1, B)
    x1_2d = x1.reshape(B * S, H)                       # free (contiguous)
    x2_2d = x2.reshape(B * S, H)

    tb = _pick_block_b(B, S, H, x1.dtype.itemsize)
    num_blocks = B // tb
    inv_t = float(1.0 / temperature)

    if fuse_head is None:
        # v7x: split so the encoder grid can use both TensorCores.
        fuse_head = not _is_v7x()

    if fuse_head:
        kernel = functools.partial(_fused_kernel, seq=S, tb=tb, batch=B,
                                   inv_temperature=inv_t)
        loss, scores = pl.pallas_call(
            kernel,
            out_shape=(jax.ShapeDtypeStruct((1, 1), jnp.float32),
                       jax.ShapeDtypeStruct((1, B), jnp.float32)),
            grid=(num_blocks,),
            in_specs=[
                pl.BlockSpec((1, B), lambda i: (0, 0)),        # labels (resident)
                pl.BlockSpec((tb * S, H), lambda i: (i, 0)),   # view-1 tokens
                pl.BlockSpec((tb * S, H), lambda i: (i, 0)),   # view-2 tokens
                pl.BlockSpec((H, H), lambda i: (0, 0)),        # decoder weight
                pl.BlockSpec((1, H), lambda i: (0, 0)),        # decoder bias
            ],
            out_specs=(pl.BlockSpec((1, 1), lambda i: (0, 0)),
                       pl.BlockSpec((1, B), lambda i: (0, 0))),
            scratch_shapes=[pltpu.VMEM((B, H), jnp.float32),   # e1 embeddings
                            pltpu.VMEM((B, H), jnp.float32)],  # e2 embeddings
            compiler_params=pltpu.CompilerParams(
                # Resident per-view scratch carries across steps; the fused
                # head needs all of it on the last step => must be arbitrary.
                dimension_semantics=("arbitrary",),
                vmem_limit_bytes=_vmem_limit_bytes(
                    tb, S, H, x1.dtype.itemsize, w_c.dtype.itemsize,
                    extra_resident_bytes=2 * B * H * 4),
            ),
        )(labels_row, x1_2d, x2_2d, w_c, b_row)
        return loss[0, 0], scores[0]

    # ---- split path (v7x): parallel encode -> HBM -> tiny head kernel ----
    e1, e2 = pl.pallas_call(
        functools.partial(_encode2_kernel, seq=S),
        out_shape=(jax.ShapeDtypeStruct((B, H), jnp.float32),
                   jax.ShapeDtypeStruct((B, H), jnp.float32)),
        grid=(num_blocks,),
        in_specs=[pl.BlockSpec((tb * S, H), lambda i: (i, 0)),
                  pl.BlockSpec((tb * S, H), lambda i: (i, 0)),
                  pl.BlockSpec((H, H), lambda i: (0, 0)),
                  pl.BlockSpec((1, H), lambda i: (0, 0))],
        out_specs=(pl.BlockSpec((tb, H), lambda i: (i, 0)),
                   pl.BlockSpec((tb, H), lambda i: (i, 0))),
        compiler_params=pltpu.CompilerParams(
            dimension_semantics=("parallel",),
            vmem_limit_bytes=_vmem_limit_bytes(
                tb, S, H, x1.dtype.itemsize, w_c.dtype.itemsize, 0),
        ),
    )(x1_2d, x2_2d, w_c, b_row)

    loss, scores = pl.pallas_call(
        functools.partial(_head_kernel, batch=B, inv_temperature=inv_t),
        out_shape=(jax.ShapeDtypeStruct((1, 1), jnp.float32),
                   jax.ShapeDtypeStruct((1, B), jnp.float32)),
        grid=(1,),
        in_specs=[pl.BlockSpec((1, B), lambda i: (0, 0)),
                  pl.BlockSpec((B, H), lambda i: (0, 0)),
                  pl.BlockSpec((B, H), lambda i: (0, 0))],
        out_specs=(pl.BlockSpec((1, 1), lambda i: (0, 0)),
                   pl.BlockSpec((1, B), lambda i: (0, 0))),
    )(labels_row, e1, e2)
    return loss[0, 0], scores[0]


def encode_texts(x, w, b):
    """Validation branch encoder: x (B, S, H) -> (B, H) sentence embeddings."""
    B, S, H = x.shape
    w_c = w.astype(x.dtype)
    b_row = jnp.asarray(b, jnp.float32).reshape(1, H)
    x_2d = x.reshape(B * S, H)
    tb = _pick_block_b(B, S, H, x.dtype.itemsize)
    num_blocks = B // tb
    return pl.pallas_call(
        functools.partial(_encode_kernel, seq=S),
        out_shape=jax.ShapeDtypeStruct((B, H), jnp.float32),
        grid=(num_blocks,),
        in_specs=[pl.BlockSpec((tb * S, H), lambda i: (i, 0)),
                  pl.BlockSpec((H, H), lambda i: (0, 0)),
                  pl.BlockSpec((1, H), lambda i: (0, 0))],
        out_specs=pl.BlockSpec((tb, H), lambda i: (i, 0)),
        compiler_params=pltpu.CompilerParams(
            dimension_semantics=("parallel",),
            vmem_limit_bytes=_vmem_limit_bytes(
                tb, S, H, x.dtype.itemsize, w_c.dtype.itemsize, 0),
        ),
    )(x_2d, w_c, b_row)


# ----------------------------------------------------------------------------
# Pure-JAX reference for sanity checks
# ----------------------------------------------------------------------------
def _reference(x1, x2, labels, w, b, temperature=0.05):
    def enc(x):
        h = jnp.tanh(jnp.einsum("bsh,hk->bsk", x, w) + b)
        return h.mean(axis=1)
    e1, e2 = enc(x1), enc(x2)
    e1n = e1 / jnp.maximum(jnp.linalg.norm(e1, axis=1, keepdims=True), 1e-8)
    e2n = e2 / jnp.maximum(jnp.linalg.norm(e2, axis=1, keepdims=True), 1e-8)
    sim = e1n @ e2n.T
    logits = sim / temperature
    lse = jax.scipy.special.logsumexp(logits, axis=1)
    loss = jnp.mean(lse - logits[jnp.arange(sim.shape[0]), labels])
    scores = sim[jnp.arange(sim.shape[0]), labels]
    return loss, scores


if __name__ == "__main__":
    B, S, H = 4, 8, 128
    temperature = 0.05

    key = jax.random.PRNGKey(0)
    k1, k2, kw = jax.random.split(key, 3)
    x1 = jax.random.normal(k1, (B, S, H), dtype=jnp.float32)
    x2 = jax.random.normal(k2, (B, S, H), dtype=jnp.float32)
    # Synthetic "decoder" parameters (deterministic init).
    w = jax.random.normal(kw, (H, H), dtype=jnp.float32) * 0.02
    b = jnp.zeros((H,), dtype=jnp.float32)
    labels = jnp.arange(B, dtype=jnp.int32)

    ref_loss, ref_scores = _reference(x1, x2, labels, w, b, temperature)

    # f32 streaming, fused single-launch kernel (v5e/v6e path): tight check.
    loss_f, scores_f = simcse_forward(x1, x2, labels, w, b, temperature,
                                      fuse_head=True)
    jax.block_until_ready((loss_f, scores_f))
    assert jnp.allclose(loss_f, ref_loss, atol=1e-4), (loss_f, ref_loss)
    assert jnp.allclose(scores_f, ref_scores, atol=1e-4), (scores_f, ref_scores)

    # f32 streaming, split encode+head (v7x / dual-TensorCore path): tight check.
    loss_s, scores_s = simcse_forward(x1, x2, labels, w, b, temperature,
                                      fuse_head=False)
    jax.block_until_ready((loss_s, scores_s))
    assert jnp.allclose(loss_s, ref_loss, atol=1e-4), (loss_s, ref_loss)
    assert jnp.allclose(scores_s, ref_scores, atol=1e-4), (scores_s, ref_scores)

    # bf16 token streaming (recommended production path), auto head selection:
    # looser tolerance (bf16 inputs on the (H, H) contraction).
    x1b = x1.astype(jnp.bfloat16)
    x2b = x2.astype(jnp.bfloat16)
    ref_loss_b, ref_scores_b = _reference(x1b.astype(jnp.float32),
                                          x2b.astype(jnp.float32),
                                          labels, w, b, temperature)
    loss_b, scores_b = simcse_forward(x1b, x2b, labels, w, b, temperature)
    jax.block_until_ready((loss_b, scores_b))
    assert jnp.allclose(loss_b, ref_loss_b, atol=5e-2), (loss_b, ref_loss_b)
    assert jnp.allclose(scores_b, ref_scores_b, atol=2e-2), (scores_b, ref_scores_b)

    # Validation branch of the module: loss = 0, scores = sentence embeddings.
    emb = encode_texts(x1, w, b)
    jax.block_until_ready(emb)
    ref_emb = jnp.tanh(jnp.einsum("bsh,hk->bsk", x1, w) + b).mean(axis=1)
    assert jnp.allclose(emb, ref_emb, atol=1e-4), "encoder mismatch"

    print("KERNEL_OK")
</pallas_src>

<mosaic_0001>
module attributes {stable_mosaic.version = 11 : i64} {
  func.func @_fused_kernel(%arg0: i32, %arg1: memref<1x4xi32, #tpu.memory_space<vmem>>, %arg2: memref<32x128xf32, #tpu.memory_space<vmem>>, %arg3: memref<32x128xf32, #tpu.memory_space<vmem>>, %arg4: memref<128x128xf32, #tpu.memory_space<vmem>>, %arg5: memref<1x128xf32, #tpu.memory_space<vmem>>, %arg6: memref<1x1xf32, #tpu.memory_space<vmem>>, %arg7: memref<1x4xf32, #tpu.memory_space<vmem>>, %arg8: memref<4x128xf32, #tpu.memory_space<vmem>>, %arg9: memref<4x128xf32, #tpu.memory_space<vmem>>) attributes {dimension_semantics = [#tpu.dimension_semantics<arbitrary>], iteration_bounds = array<i64: 1>, scalar_prefetch = 0 : i64, scratch_operands = 2 : i64, tpu.core_type = #tpu.core_type<tc>, window_params = [{pipeline_mode = #tpu.pipeline_mode<synchronous>, transform_indices = @transform_0, window_bounds = array<i64: 1, 4>}, {transform_indices = @transform_1, window_bounds = array<i64: 32, 128>}, {transform_indices = @transform_2, window_bounds = array<i64: 32, 128>}, {pipeline_mode = #tpu.pipeline_mode<synchronous>, transform_indices = @transform_3, window_bounds = array<i64: 128, 128>}, {pipeline_mode = #tpu.pipeline_mode<synchronous>, transform_indices = @transform_4, window_bounds = array<i64: 1, 128>}, {pipeline_mode = #tpu.pipeline_mode<synchronous>, transform_indices = @transform_5, window_bounds = array<i64: 1, 1>}, {pipeline_mode = #tpu.pipeline_mode<synchronous>, transform_indices = @transform_6, window_bounds = array<i64: 1, 4>}]} {
    %c4_i32 = arith.constant 4 : i32
    %0 = arith.muli %arg0, %c4_i32 : i32
    %c0 = arith.constant 0 : index
    %c0_0 = arith.constant 0 : index
    %1 = vector.load %arg4[%c0, %c0_0] : memref<128x128xf32, #tpu.memory_space<vmem>>, vector<128x128xf32>
    %c0_1 = arith.constant 0 : index
    %c0_2 = arith.constant 0 : index
    %2 = vector.load %arg5[%c0_1, %c0_2] : memref<1x128xf32, #tpu.memory_space<vmem>>, vector<1x128xf32>
    %c0_3 = arith.constant 0 : index
    %c0_4 = arith.constant 0 : index
    %3 = vector.load %arg2[%c0_3, %c0_4] : memref<32x128xf32, #tpu.memory_space<vmem>>, vector<32x128xf32>
    %cst = arith.constant dense<0.000000e+00> : vector<32x128xf32>
    %4 = tpu.matmul %3, %1, %cst {dimension_numbers = #tpu.dot_dimension_numbers<[1], [0], [0], [1], [0, 0, 1, 1], [], []>} : vector<32x128xf32>, vector<128x128xf32>, vector<32x128xf32> -> vector<32x128xf32>
    %5 = vector.broadcast %2 : vector<1x128xf32> to vector<32x128xf32>
    %6 = arith.addf %4, %5 : vector<32x128xf32>
    %7 = math.tanh %6 : vector<32x128xf32>
    %8 = vector.shape_cast %7 : vector<32x128xf32> to vector<4x8x128xf32>
    %cst_5 = arith.constant dense<0.000000e+00> : vector<4x128xf32>
    %9 = vector.multi_reduction <add>, %8, %cst_5 [1] : vector<4x8x128xf32> to vector<4x128xf32>
    %cst_6 = arith.constant 8.000000e+00 : f32
    %10 = vector.broadcast %cst_6 : f32 to vector<4x128xf32>
    %11 = arith.divf %9, %10 : vector<4x128xf32>
    %12 = arith.index_cast %0 : i32 to index
    %c0_7 = arith.constant 0 : index
    %13 = vector.load %arg8[%12, %c0_7] : memref<4x128xf32, #tpu.memory_space<vmem>>, vector<4x128xf32>
    tpu.vector_store %arg8[%12, %c0_7], %11 {strides = array<i32>} : memref<4x128xf32, #tpu.memory_space<vmem>>, vector<4x128xf32>,
    %c0_8 = arith.constant 0 : index
    %c0_9 = arith.constant 0 : index
    %14 = vector.load %arg3[%c0_8, %c0_9] : memref<32x128xf32, #tpu.memory_space<vmem>>, vector<32x128xf32>
    %cst_10 = arith.constant dense<0.000000e+00> : vector<32x128xf32>
    %15 = tpu.matmul %14, %1, %cst_10 {dimension_numbers = #tpu.dot_dimension_numbers<[1], [0], [0], [1], [0, 0, 1, 1], [], []>} : vector<32x128xf32>, vector<128x128xf32>, vector<32x128xf32> -> vector<32x128xf32>
    %16 = vector.broadcast %2 : vector<1x128xf32> to vector<32x128xf32>
    %17 = arith.addf %15, %16 : vector<32x128xf32>
    %18 = math.tanh %17 : vector<32x128xf32>
    %19 = vector.shape_cast %18 : vector<32x128xf32> to vector<4x8x128xf32>
    %cst_11 = arith.constant dense<0.000000e+00> : vector<4x128xf32>
    %20 = vector.multi_reduction <add>, %19, %cst_11 [1] : vector<4x8x128xf32> to vector<4x128xf32>
    %cst_12 = arith.constant 8.000000e+00 : f32
    %21 = vector.broadcast %cst_12 : f32 to vector<4x128xf32>
    %22 = arith.divf %20, %21 : vector<4x128xf32>
    %23 = arith.index_cast %0 : i32 to index
    %c0_13 = arith.constant 0 : index
    %24 = vector.load %arg9[%23, %c0_13] : memref<4x128xf32, #tpu.memory_space<vmem>>, vector<4x128xf32>
    tpu.vector_store %arg9[%23, %c0_13], %22 {strides = array<i32>} : memref<4x128xf32, #tpu.memory_space<vmem>>, vector<4x128xf32>,
    %c0_i32 = arith.constant 0 : i32
    %25 = arith.cmpi eq, %arg0, %c0_i32 : i32
    %26 = arith.extui %25 : i1 to i32
    %c0_i32_14 = arith.constant 0 : i32
    %27 = arith.cmpi ne, %26, %c0_i32_14 : i32
    scf.if %27 {
      %c0_15 = arith.constant 0 : index
      %c0_16 = arith.constant 0 : index
      %28 = vector.load %arg1[%c0_15, %c0_16] : memref<1x4xi32, #tpu.memory_space<vmem>>, vector<1x4xi32>
      %c0_17 = arith.constant 0 : index
      %c0_18 = arith.constant 0 : index
      %29 = vector.load %arg8[%c0_17, %c0_18] : memref<4x128xf32, #tpu.memory_space<vmem>>, vector<4x128xf32>
      %c0_19 = arith.constant 0 : index
      %c0_20 = arith.constant 0 : index
      %30 = vector.load %arg9[%c0_19, %c0_20] : memref<4x128xf32, #tpu.memory_space<vmem>>, vector<4x128xf32>
      %31 = arith.mulf %29, %29 : vector<4x128xf32>
      %cst_21 = arith.constant dense<0.000000e+00> : vector<4xf32>
      %32 = vector.multi_reduction <add>, %31, %cst_21 [1] : vector<4x128xf32> to vector<4xf32>
      %33 = vector.shape_cast %32 : vector<4xf32> to vector<4x1xf32>
      %cst_22 = arith.constant 1.000000e-16 : f32
      %34 = vector.broadcast %cst_22 : f32 to vector<4x1xf32>
      %35 = arith.maximumf %33, %34 : vector<4x1xf32>
      %36 = math.rsqrt %35 : vector<4x1xf32>
      %37 = arith.mulf %30, %30 : vector<4x128xf32>
      %cst_23 = arith.constant dense<0.000000e+00> : vector<4xf32>
      %38 = vector.multi_reduction <add>, %37, %cst_23 [1] : vector<4x128xf32> to vector<4xf32>
      %39 = vector.shape_cast %38 : vector<4xf32> to vector<4x1xf32>
      %cst_24 = arith.constant 1.000000e-16 : f32
      %40 = vector.broadcast %cst_24 : f32 to vector<4x1xf32>
      %41 = arith.maximumf %39, %40 : vector<4x1xf32>
      %42 = math.rsqrt %41 : vector<4x1xf32>
      %43 = vector.broadcast %36 : vector<4x1xf32> to vector<4x128xf32>
      %44 = arith.mulf %29, %43 : vector<4x128xf32>
      %45 = vector.broadcast %42 : vector<4x1xf32> to vector<4x128xf32>
      %46 = arith.mulf %30, %45 : vector<4x128xf32>
      %cst_25 = arith.constant dense<0.000000e+00> : vector<4x4xf32>
      %47 = tpu.matmul %46, %44, %cst_25 {dimension_numbers = #tpu.dot_dimension_numbers<[1], [1], [0], [0], [0, 0, 1, 0], [], []>} : vector<4x128xf32>, vector<4x128xf32>, vector<4x4xf32> -> vector<4x4xf32>
      %48 = tpu.iota {dimensions = array<i32: 0>} : vector<4x4xi32>
      %49 = vector.broadcast %28 : vector<1x4xi32> to vector<4x4xi32>
      %50 = arith.cmpi eq, %48, %49 : vector<4x4xi32>
      %cst_26 = arith.constant 2.000000e+01 : f32
      %51 = vector.broadcast %cst_26 : f32 to vector<4x4xf32>
      %52 = arith.mulf %47, %51 : vector<4x4xf32>
      %cst_27 = arith.constant dense<0xFF800000> : vector<4xf32>
      %53 = vector.multi_reduction <maximumf>, %52, %cst_27 [0] : vector<4x4xf32> to vector<4xf32>
      %54 = vector.shape_cast %53 : vector<4xf32> to vector<1x4xf32>
      %55 = vector.broadcast %54 : vector<1x4xf32> to vector<4x4xf32>
      %56 = arith.subf %52, %55 : vector<4x4xf32>
      %57 = math.exp %56 : vector<4x4xf32>
      %cst_28 = arith.constant dense<0.000000e+00> : vector<4xf32>
      %58 = vector.multi_reduction <add>, %57, %cst_28 [0] : vector<4x4xf32> to vector<4xf32>
      %59 = vector.shape_cast %58 : vector<4xf32> to vector<1x4xf32>
      %60 = math.log %59 : vector<1x4xf32>
      %61 = arith.addf %60, %54 : vector<1x4xf32>
      %cst_29 = arith.constant 0.000000e+00 : f32
      %62 = vector.broadcast %cst_29 : f32 to vector<4x4xf32>
      %63 = arith.select %50, %52, %62 : vector<4x4xi1>, vector<4x4xf32>
      %cst_30 = arith.constant dense<0.000000e+00> : vector<4xf32>
      %64 = vector.multi_reduction <add>, %63, %cst_30 [0] : vector<4x4xf32> to vector<4xf32>
      %65 = vector.shape_cast %64 : vector<4xf32> to vector<1x4xf32>
      %66 = arith.subf %61, %65 : vector<1x4xf32>
      %67 = vector.shape_cast %66 : vector<1x4xf32> to vector<1x1x4xf32>
      %cst_31 = arith.constant dense<0.000000e+00> : vector<1xf32>
      %68 = vector.multi_reduction <add>, %67, %cst_31 [1, 2] : vector<1x1x4xf32> to vector<1xf32>
      %69 = vector.shape_cast %68 : vector<1xf32> to vector<1x1x1xf32>
      %70 = vector.extract %69[0, 0, 0] : f32 from vector<1x1x1xf32>
      %cst_32 = arith.constant 4.000000e+00 : f32
      %71 = arith.divf %70, %cst_32 : f32
      %72 = vector.broadcast %71 : f32 to vector<1x1xf32>
      %cst_33 = arith.constant 0.000000e+00 : f32
      %73 = vector.broadcast %cst_33 : f32 to vector<4x4xf32>
      %74 = arith.select %50, %47, %73 : vector<4x4xi1>, vector<4x4xf32>
      %cst_34 = arith.constant dense<0.000000e+00> : vector<4xf32>
      %75 = vector.multi_reduction <add>, %74, %cst_34 [0] : vector<4x4xf32> to vector<4xf32>
      %76 = vector.shape_cast %75 : vector<4xf32> to vector<1x4xf32>
      %c0_35 = arith.constant 0 : index
      %c0_36 = arith.constant 0 : index
      %77 = vector.load %arg6[%c0_35, %c0_36] : memref<1x1xf32, #tpu.memory_space<vmem>>, vector<1x1xf32>
      tpu.vector_store %arg6[%c0_35, %c0_36], %72 {strides = array<i32>} : memref<1x1xf32, #tpu.memory_space<vmem>>, vector<1x1xf32>,
      %c0_37 = arith.constant 0 : index
      %c0_38 = arith.constant 0 : index
      %78 = vector.load %arg7[%c0_37, %c0_38] : memref<1x4xf32, #tpu.memory_space<vmem>>, vector<1x4xf32>
      tpu.vector_store %arg7[%c0_37, %c0_38], %76 {strides = array<i32>} : memref<1x4xf32, #tpu.memory_space<vmem>>, vector<1x4xf32>,
    } else {
    }
    return
  }
  func.func @transform_0(%arg0: i32) -> (i32, i32) {
    %c0_i32 = arith.constant 0 : i32
    %c0_i32_0 = arith.constant 0 : i32
    %c0_i32_1 = arith.constant 0 : i32
    return %c0_i32, %c0_i32_0 : i32, i32
  }
  func.func @transform_1(%arg0: i32) -> (i32, i32) {
    %c0_i32 = arith.constant 0 : i32
    %c0_i32_0 = arith.constant 0 : i32
    return %arg0, %c0_i32 : i32, i32
  }
  func.func @transform_2(%arg0: i32) -> (i32, i32) {
    %c0_i32 = arith.constant 0 : i32
    %c0_i32_0 = arith.constant 0 : i32
    return %arg0, %c0_i32 : i32, i32
  }
  func.func @transform_3(%arg0: i32) -> (i32, i32) {
    %c0_i32 = arith.constant 0 : i32
    %c0_i32_0 = arith.constant 0 : i32
    %c0_i32_1 = arith.constant 0 : i32
    return %c0_i32, %c0_i32_0 : i32, i32
  }
  func.func @transform_4(%arg0: i32) -> (i32, i32) {
    %c0_i32 = arith.constant 0 : i32
    %c0_i32_0 = arith.constant 0 : i32
    %c0_i32_1 = arith.constant 0 : i32
    return %c0_i32, %c0_i32_0 : i32, i32
  }
  func.func @transform_5(%arg0: i32) -> (i32, i32) {
    %c0_i32 = arith.constant 0 : i32
    %c0_i32_0 = arith.constant 0 : i32
    %c0_i32_1 = arith.constant 0 : i32
    return %c0_i32, %c0_i32_0 : i32, i32
  }
  func.func @transform_6(%arg0: i32) -> (i32, i32) {
    %c0_i32 = arith.constant 0 : i32
    %c0_i32_0 = arith.constant 0 : i32
    %c0_i32_1 = arith.constant 0 : i32
    return %c0_i32, %c0_i32_0 : i32, i32
  }
}

</mosaic_0001>

<llo_original>
// kernel: tpu_custom_call.1
$region0: #{tpu_custom_call.1}
  #allocation0 [shape = 'u32[]', space=smem, size = 0x4, offset = 0x4, fixed_abs, tag = 'smem constant byte address 0x4 - core index']
  #allocation1 [shape = 'u32[144,128]{1,0:T(1,128)}', space=vmem, size = 0x12000, scoped, tag = 'internal scratch']
  #allocation2 [shape = 'f32[4,128]{1,0:T(4,128)}', space=vmem, size = 0x800, scoped, tag = 'scratch operand']
  #allocation3 [shape = 'f32[4,128]{1,0:T(4,128)}', space=vmem, size = 0x800, scoped, tag = 'scratch operand']
  %s0 = inlined_call_operand.hbm [shape: s32[1,4], index: 0, kind: input, shape index: {}]
  %s1 = inlined_call_operand.hbm [shape: f32[32,128], index: 1, kind: input, shape index: {}]
  %s2 = inlined_call_operand.hbm [shape: f32[32,128], index: 2, kind: input, shape index: {}]
  %s3 = inlined_call_operand.hbm [shape: f32[128,128], index: 3, kind: input, shape index: {}]
  %s4 = inlined_call_operand.vmem [shape: f32[1,128], index: 4, kind: input, shape index: {}]
  %s5 = inlined_call_operand.hbm [shape: f32[1,1], index: 5, kind: output, shape index: {0}]
  %s6 = inlined_call_operand.hbm [shape: f32[1,4], index: 6, kind: output, shape index: {1}]
  %7 = xla_tuple %s5, %s6
  %s8 = sld [smem:[#allocation0]]
  $region58: #{tpu_custom_call.1} parent=0
    _
  %s10 = ssub.s32 1, %s8
  %s11 = scalar_select 0, %s10, %s8
  $region1: #{tpu_custom_call.1} parent=0
    #allocation4 [shape = 'u8[512]{0}', space=vmem, size = 0x400, scoped, tag = 'input window, operand 0, single buffered']
    #allocation5 [shape = 's32[1]{0}', space=sflag, size = 0x4, scoped, tag = 'scoped memory for tpu_custom_call.1']
    #allocation6 [shape = 's32[1]{0}', space=sflag, size = 0x4, scoped, tag = 'scoped memory for tpu_custom_call.1']
    #allocation7 [shape = 'u8[16384]{0}', space=vmem, size = 0x4000, scoped, tag = 'input window, operand 1, single buffered']
    #allocation8 [shape = 's32[1]{0}', space=sflag, size = 0x4, scoped, tag = 'scoped memory for tpu_custom_call.1']
    #allocation9 [shape = 'u8[16384]{0}', space=vmem, size = 0x4000, scoped, tag = 'input window, operand 2, single buffered']
    #allocation10 [shape = 'u8[65536]{0}', space=vmem, size = 0x10000, scoped, tag = 'input window, operand 3, single buffered']
    #allocation11 [shape = 's32[1]{0}', space=sflag, size = 0x4, scoped, tag = 'scoped memory for tpu_custom_call.1']
    #allocation12 [shape = 'u8[512]{0}', space=vmem, size = 0x400, scoped, tag = 'output window, operand 0, single buffered']
    #allocation13 [shape = 'u8[512]{0}', space=vmem, size = 0x400, scoped, tag = 'output window, operand 1, single buffered']
    #allocation14 [shape = 's32[1]{0}', space=sflag, size = 0x4, scoped, tag = 'scoped memory for tpu_custom_call.1']
    %12 = vsyncpa [#allocation5], 0
    %13 = vsyncpa [#allocation8], 0
    %14 = vsyncpa [#allocation11], 0
    %15 = vsyncpa [#allocation6], 0
    %16 = vsyncpa [#allocation14], 0
    // Predicated region
    $region2: #{tpu_custom_call.1} parent=1 // pred_check
      _
    $region3: #{tpu_custom_call.1} parent=1 // pred_check_branch
      %18 = sbr.rel (0) target = $region5
    $region4: #{tpu_custom_call.1} parent=1 // pred_region
      %s20 = ssub.s32 16, 16
      %21 = vsyncadd [#allocation5], %s20
      %s23 = sshll.u32 [#allocation4], 4
      %s24 = int_to_ptr.vmem [resolvable:$true] %s23
      %26 = dma.hbm_to_vmem [thread:$0]  %s0, 16, %s24, [#allocation5]
    $region5: #{tpu_custom_call.1} parent=1 // pred_fallthru
      _
    // Predicated region
    $region6: #{tpu_custom_call.1} parent=1 // pred_check
      _
    $region7: #{tpu_custom_call.1} parent=1 // pred_check_branch
      %28 = sbr.rel (0) target = $region9
    $region8: #{tpu_custom_call.1} parent=1 // pred_region
      %s30 = ssub.s32 512, 512
      %31 = vsyncadd [#allocation8], %s30
      %s32 = sshll.u32 [#allocation7], 4
      %s33 = int_to_ptr.vmem [resolvable:$true] %s32
      %38 = dma.hbm_to_vmem [thread:$0]  %s1, 512, %s33, [#allocation8], 128, 128, 8
    $region9: #{tpu_custom_call.1} parent=1 // pred_fallthru
      _
    // Predicated region
    $region10: #{tpu_custom_call.1} parent=1 // pred_check
      _
    $region11: #{tpu_custom_call.1} parent=1 // pred_check_branch
      %40 = sbr.rel (0) target = $region13
    $region12: #{tpu_custom_call.1} parent=1 // pred_region
      %s42 = ssub.s32 512, 512
      %43 = vsyncadd [#allocation8], %s42
      %s44 = sshll.u32 [#allocation9], 4
      %s45 = int_to_ptr.vmem [resolvable:$true] %s44
      %50 = dma.hbm_to_vmem [thread:$0]  %s2, 512, %s45, [#allocation8], 128, 128, 8
    $region13: #{tpu_custom_call.1} parent=1 // pred_fallthru
      _
    // Predicated region
    $region14: #{tpu_custom_call.1} parent=1 // pred_check
      _
    $region15: #{tpu_custom_call.1} parent=1 // pred_check_branch
      %52 = sbr.rel (0) target = $region17
    $region16: #{tpu_custom_call.1} parent=1 // pred_region
      %s54 = ssub.s32 2048, 2048
      %55 = vsyncadd [#allocation11], %s54
      %s56 = sshll.u32 [#allocation10], 4
      %s57 = int_to_ptr.vmem [resolvable:$true] %s56
      %62 = dma.hbm_to_vmem [thread:$0]  %s3, 2048, %s57, [#allocation11], 128, 128, 8
    $region17: #{tpu_custom_call.1} parent=1 // pred_fallthru
      _
    // Predicated region
    $region18: #{tpu_custom_call.1} parent=1 // pred_check
      _
    $region19: #{tpu_custom_call.1} parent=1 // pred_check_branch
      %64 = sbr.rel (0) target = $region21
    $region20: #{tpu_custom_call.1} parent=1 // pred_region
      _
    $region21: #{tpu_custom_call.1} parent=1 // pred_fallthru
      _
    // Predicated region
    $region22: #{tpu_custom_call.1} parent=1 // pred_check
      _
    $region23: #{tpu_custom_call.1} parent=1 // pred_check_branch
      %66 = sbr.rel (0) target = $region25
    $region24: #{tpu_custom_call.1} parent=1 // pred_region
      %67 = dma.done [#allocation5], 16
    $region25: #{tpu_custom_call.1} parent=1 // pred_fallthru
      _
    // Predicated region
    $region26: #{tpu_custom_call.1} parent=1 // pred_check
      _
    $region27: #{tpu_custom_call.1} parent=1 // pred_check_branch
      %69 = sbr.rel (0) target = $region29
    $region28: #{tpu_custom_call.1} parent=1 // pred_region
      %70 = dma.done [#allocation8], 512
    $region29: #{tpu_custom_call.1} parent=1 // pred_fallthru
      _
    // Predicated region
    $region30: #{tpu_custom_call.1} parent=1 // pred_check
      _
    $region31: #{tpu_custom_call.1} parent=1 // pred_check_branch
      %72 = sbr.rel (0) target = $region33
    $region32: #{tpu_custom_call.1} parent=1 // pred_region
      %73 = dma.done [#allocation8], 512
    $region33: #{tpu_custom_call.1} parent=1 // pred_fallthru
      _
    // Predicated region
    $region34: #{tpu_custom_call.1} parent=1 // pred_check
      _
    $region35: #{tpu_custom_call.1} parent=1 // pred_check_branch
      %75 = sbr.rel (0) target = $region37
    $region36: #{tpu_custom_call.1} parent=1 // pred_region
      %76 = dma.done [#allocation11], 2048
    $region37: #{tpu_custom_call.1} parent=1 // pred_fallthru
      _
    %s77 = smul.u32 0, 4
    %v78 = vld [vmem:[#allocation10] sm:$0xff]
    %v79 = vld [vmem:[#allocation10 + $0x8] sm:$0xff]
    %v80 = vld [vmem:[#allocation10 + $0x10] sm:$0xff]
    %v81 = vld [vmem:[#allocation10 + $0x18] sm:$0xff]
    %v82 = vld [vmem:[#allocation10 + $0x20] sm:$0xff]
    %v83 = vld [vmem:[#allocation10 + $0x28] sm:$0xff]
    %v84 = vld [vmem:[#allocation10 + $0x30] sm:$0xff]
    %v85 = vld [vmem:[#allocation10 + $0x38] sm:$0xff]
    %v86 = vld [vmem:[#allocation10 + $0x40] sm:$0xff]
    %v87 = vld [vmem:[#allocation10 + $0x48] sm:$0xff]
    %v88 = vld [vmem:[#allocation10 + $0x50] sm:$0xff]
    %v89 = vld [vmem:[#allocation10 + $0x58] sm:$0xff]
    %v90 = vld [vmem:[#allocation10 + $0x60] sm:$0xff]
    %v91 = vld [vmem:[#allocation10 + $0x68] sm:$0xff]
    %v92 = vld [vmem:[#allocation10 + $0x70] sm:$0xff]
    %v93 = vld [vmem:[#allocation10 + $0x78] sm:$0xff]
    %v94 = vld [vmem:[%s4] sm:$0x1]
    %v95 = vld [vmem:[#allocation7] sm:$0xff]
    %v96 = vld [vmem:[#allocation7 + $0x8] sm:$0xff]
    %v97 = vld [vmem:[#allocation7 + $0x10] sm:$0xff]
    %v98 = vld [vmem:[#allocation7 + $0x18] sm:$0xff]
    %v100 = vlaneseq
    %v101 = vshrl.u32 %v100, 7
    %v102 = vsub.s32 0, %v101
    %v103 = vrot.slane %v94, %v102
    %105 = vmatprep.subr.mxu0 0.0
    %106 = vmatpush1.msra.mxu0 %v93
    %107 = vmatprep.subr.mxu0 0.0
    %108 = vmatpush1.msra.mxu0 %v92
    %109 = vmatprep.subr.mxu0 0.0
    %110 = vmatpush1.msra.mxu0 %v91
    %111 = vmatprep.subr.mxu0 0.0
    %112 = vmatpush1.msra.mxu0 %v90
    %113 = vmatprep.subr.mxu0 0.0
    %114 = vmatpush1.msra.mxu0 %v89
    %115 = vmatprep.subr.mxu0 0.0
    %116 = vmatpush1.msra.mxu0 %v88
    %117 = vmatprep.subr.mxu0 0.0
    %118 = vmatpush1.msra.mxu0 %v87
    %119 = vmatprep.subr.mxu0 0.0
    %120 = vmatpush1.msra.mxu0 %v86
    %121 = vmatprep.subr.mxu0 0.0
    %122 = vmatpush1.msra.mxu0 %v85
    %123 = vmatprep.subr.mxu0 0.0
    %124 = vmatpush1.msra.mxu0 %v84
    %125 = vmatprep.subr.mxu0 0.0
    %126 = vmatpush1.msra.mxu0 %v83
    %127 = vmatprep.subr.mxu0 0.0
    %128 = vmatpush1.msra.mxu0 %v82
    %129 = vmatprep.subr.mxu0 0.0
    %130 = vmatpush1.msra.mxu0 %v81
    %131 = vmatprep.subr.mxu0 0.0
    %132 = vmatpush1.msra.mxu0 %v80
    %133 = vmatprep.subr.mxu0 0.0
    %134 = vmatpush1.msra.mxu0 %v79
    %135 = vmatprep.subr.mxu0 0.0
    %136 = vmatpush1.msra.mxu0 %v78
    %137 = vmatprep.subr.mxu0 0.0
    %138 = vmatpush2.msra.mxu0 0.0
    %139 = vmatprep.subr.mxu0 0.0
    %140 = vmatpush2.msra.mxu0 0.0
    %141 = vmatprep.subr.mxu0 0.0
    %142 = vmatpush2.msra.mxu0 0.0
    %143 = vmatprep.subr.mxu0 0.0
    %144 = vmatpush2.msra.mxu0 0.0
    %145 = vmatprep.subr.mxu0 0.0
    %146 = vmatpush2.msra.mxu0 0.0
    %147 = vmatprep.subr.mxu0 0.0
    %148 = vmatpush2.msra.mxu0 0.0
    %149 = vmatprep.subr.mxu0 0.0
    %150 = vmatpush2.msra.mxu0 0.0
    %151 = vmatprep.subr.mxu0 0.0
    %152 = vmatpush2.msra.mxu0 0.0
    %153 = vmatprep.subr.mxu0 0.0
    %154 = vmatpush2.msra.mxu0 0.0
    %155 = vmatprep.subr.mxu0 0.0
    %156 = vmatpush2.msra.mxu0 0.0
    %157 = vmatprep.subr.mxu0 0.0
    %158 = vmatpush2.msra.mxu0 0.0
    %159 = vmatprep.subr.mxu0 0.0
    %160 = vmatpush2.msra.mxu0 0.0
    %161 = vmatprep.subr.mxu0 0.0
    %162 = vmatpush2.msra.mxu0 0.0
    %163 = vmatprep.subr.mxu0 0.0
    %164 = vmatpush2.msra.mxu0 0.0
    %165 = vmatprep.subr.mxu0 0.0
    %166 = vmatpush2.msra.mxu0 0.0
    %167 = vmatprep.subr.mxu0 0.0
    %168 = vmatpush2.msra.mxu0 0.0
    %169 = vmatprep.mubr.f32.mxu0 0.0
    %170 = vmatmul.mubr.f32.gmra.mxu0 %v95
    %v171 = vpop.f32.mrf.mxu0
    %v172 = vadd.f32 %v103, %v171
    %v173 = vpop.f32.mrf.mxu0
    %174 = vmatprep.mubr.f32.mxu0 0.0
    %175 = vmatmul.mubr.f32.gmra.mxu0 %v96
    %v176 = vpop.f32.mrf.mxu0
    %v177 = vadd.f32 %v103, %v176
    %v178 = vpop.f32.mrf.mxu0
    %179 = vmatprep.mubr.f32.mxu0 0.0
    %180 = vmatmul.mubr.f32.gmra.mxu0 %v97
    %v181 = vpop.f32.mrf.mxu0
    %v182 = vadd.f32 %v103, %v181
    %v183 = vpop.f32.mrf.mxu0
    %184 = vmatprep.mubr.f32.mxu0 0.0
    %185 = vmatmul.mubr.f32.gmra.mxu0 %v98
    %v186 = vpop.f32.mrf.mxu0
    %v187 = vadd.f32 %v103, %v186
    %v188 = vpop.f32.mrf.mxu0
    %189 = vdwg.mxu0
    %v190 = vtanh.pop %v172
    %v191 = vtanh.pop %v177
    %v192 = vtanh.pop %v182
    %v193 = vtanh.pop %v187
    %v194 = vrot.slane %v190, 4
    %v195 = vadd.f32 %v190, %v194
    %v196 = vrot.slane %v195, 2
    %v197 = vadd.f32 %v195, %v196
    %v198 = vrot.slane %v197, 1
    %v199 = vadd.f32 %v197, %v198
    %v200 = vrot.slane %v191, 4
    %v201 = vadd.f32 %v191, %v200
    %v202 = vrot.slane %v201, 2
    %v203 = vadd.f32 %v201, %v202
    %v204 = vrot.slane %v203, 1
    %v205 = vadd.f32 %v203, %v204
    %v206 = vrot.slane %v192, 4
    %v207 = vadd.f32 %v192, %v206
    %v208 = vrot.slane %v207, 2
    %v209 = vadd.f32 %v207, %v208
    %v210 = vrot.slane %v209, 1
    %v211 = vadd.f32 %v209, %v210
    %v212 = vrot.slane %v193, 4
    %v213 = vadd.f32 %v193, %v212
    %v214 = vrot.slane %v213, 2
    %v215 = vadd.f32 %v213, %v214
    %v216 = vrot.slane %v215, 1
    %v217 = vadd.f32 %v215, %v216
    %v218 = vrcp.pop 8.0
    %v219 = vmul.f32 %v199, %v218
    %v220 = vmul.f32 %v205, %v218
    %v221 = vmul.f32 %v211, %v218
    %v222 = vmul.f32 %v217, %v218
    %vm227 = vcmask 1041409
    %v228 = vsel %vm227, %v220, %v219
    %vm229 = vcmask 1042434
    %v230 = vsel %vm229, %v221, %v228
    %vm231 = vcmask 1043459
    %v232 = vsel %vm231, %v222, %v230
    %s234 = scalar_lea.vmem [#allocation2], %s77
    %235 = vst [vmem:[%s234] sm:$0xf] %v232
    %v236 = vld [vmem:[#allocation9] sm:$0xff]
    %v237 = vld [vmem:[#allocation9 + $0x8] sm:$0xff]
    %v238 = vld [vmem:[#allocation9 + $0x10] sm:$0xff]
    %v239 = vld [vmem:[#allocation9 + $0x18] sm:$0xff]
    %240 = vmatprep.subr.mxu0 0.0
    %241 = vmatpush1.msra.mxu0 %v93
    %242 = vmatprep.subr.mxu0 0.0
    %243 = vmatpush1.msra.mxu0 %v92
    %244 = vmatprep.subr.mxu0 0.0
    %245 = vmatpush1.msra.mxu0 %v91
    %246 = vmatprep.subr.mxu0 0.0
    %247 = vmatpush1.msra.mxu0 %v90
    %248 = vmatprep.subr.mxu0 0.0
    %249 = vmatpush1.msra.mxu0 %v89
    %250 = vmatprep.subr.mxu0 0.0
    %251 = vmatpush1.msra.mxu0 %v88
    %252 = vmatprep.subr.mxu0 0.0
    %253 = vmatpush1.msra.mxu0 %v87
    %254 = vmatprep.subr.mxu0 0.0
    %255 = vmatpush1.msra.mxu0 %v86
    %256 = vmatprep.subr.mxu0 0.0
    %257 = vmatpush1.msra.mxu0 %v85
    %258 = vmatprep.subr.mxu0 0.0
    %259 = vmatpush1.msra.mxu0 %v84
    %260 = vmatprep.subr.mxu0 0.0
    %261 = vmatpush1.msra.mxu0 %v83
    %262 = vmatprep.subr.mxu0 0.0
    %263 = vmatpush1.msra.mxu0 %v82
    %264 = vmatprep.subr.mxu0 0.0
    %265 = vmatpush1.msra.mxu0 %v81
    %266 = vmatprep.subr.mxu0 0.0
    %267 = vmatpush1.msra.mxu0 %v80
    %268 = vmatprep.subr.mxu0 0.0
    %269 = vmatpush1.msra.mxu0 %v79
    %270 = vmatprep.subr.mxu0 0.0
    %271 = vmatpush1.msra.mxu0 %v78
    %272 = vmatprep.subr.mxu0 0.0
    %273 = vmatpush2.msra.mxu0 0.0
    %274 = vmatprep.subr.mxu0 0.0
    %275 = vmatpush2.msra.mxu0 0.0
    %276 = vmatprep.subr.mxu0 0.0
    %277 = vmatpush2.msra.mxu0 0.0
    %278 = vmatprep.subr.mxu0 0.0
    %279 = vmatpush2.msra.mxu0 0.0
    %280 = vmatprep.subr.mxu0 0.0
    %281 = vmatpush2.msra.mxu0 0.0
    %282 = vmatprep.subr.mxu0 0.0
    %283 = vmatpush2.msra.mxu0 0.0
    %284 = vmatprep.subr.mxu0 0.0
    %285 = vmatpush2.msra.mxu0 0.0
    %286 = vmatprep.subr.mxu0 0.0
    %287 = vmatpush2.msra.mxu0 0.0
    %288 = vmatprep.subr.mxu0 0.0
    %289 = vmatpush2.msra.mxu0 0.0
    %290 = vmatprep.subr.mxu0 0.0
    %291 = vmatpush2.msra.mxu0 0.0
    %292 = vmatprep.subr.mxu0 0.0
    %293 = vmatpush2.msra.mxu0 0.0
    %294 = vmatprep.subr.mxu0 0.0
    %295 = vmatpush2.msra.mxu0 0.0
    %296 = vmatprep.subr.mxu0 0.0
    %297 = vmatpush2.msra.mxu0 0.0
    %298 = vmatprep.subr.mxu0 0.0
    %299 = vmatpush2.msra.mxu0 0.0
    %300 = vmatprep.subr.mxu0 0.0
    %301 = vmatpush2.msra.mxu0 0.0
    %302 = vmatprep.subr.mxu0 0.0
    %303 = vmatpush2.msra.mxu0 0.0
    %304 = vmatprep.mubr.f32.mxu0 0.0
    %305 = vmatmul.mubr.f32.gmra.mxu0 %v236
    %v306 = vpop.f32.mrf.mxu0
    %v307 = vadd.f32 %v103, %v306
    %v308 = vpop.f32.mrf.mxu0
    %309 = vmatprep.mubr.f32.mxu0 0.0
    %310 = vmatmul.mubr.f32.gmra.mxu0 %v237
    %v311 = vpop.f32.mrf.mxu0
    %v312 = vadd.f32 %v103, %v311
    %v313 = vpop.f32.mrf.mxu0
    %314 = vmatprep.mubr.f32.mxu0 0.0
    %315 = vmatmul.mubr.f32.gmra.mxu0 %v238
    %v316 = vpop.f32.mrf.mxu0
    %v317 = vadd.f32 %v103, %v316
    %v318 = vpop.f32.mrf.mxu0
    %319 = vmatprep.mubr.f32.mxu0 0.0
    %320 = vmatmul.mubr.f32.gmra.mxu0 %v239
    %v321 = vpop.f32.mrf.mxu0
    %v322 = vadd.f32 %v103, %v321
    %v323 = vpop.f32.mrf.mxu0
    %324 = vdwg.mxu0
    %v325 = vtanh.pop %v307
    %v326 = vtanh.pop %v312
    %v327 = vtanh.pop %v317
    %v328 = vtanh.pop %v322
    %v329 = vrot.slane %v325, 4
    %v330 = vadd.f32 %v325, %v329
    %v331 = vrot.slane %v330, 2
    %v332 = vadd.f32 %v330, %v331
    %v333 = vrot.slane %v332, 1
    %v334 = vadd.f32 %v332, %v333
    %v335 = vrot.slane %v326, 4
    %v336 = vadd.f32 %v326, %v335
    %v337 = vrot.slane %v336, 2
    %v338 = vadd.f32 %v336, %v337
    %v339 = vrot.slane %v338, 1
    %v340 = vadd.f32 %v338, %v339
    %v341 = vrot.slane %v327, 4
    %v342 = vadd.f32 %v327, %v341
    %v343 = vrot.slane %v342, 2
    %v344 = vadd.f32 %v342, %v343
    %v345 = vrot.slane %v344, 1
    %v346 = vadd.f32 %v344, %v345
    %v347 = vrot.slane %v328, 4
    %v348 = vadd.f32 %v328, %v347
    %v349 = vrot.slane %v348, 2
    %v350 = vadd.f32 %v348, %v349
    %v351 = vrot.slane %v350, 1
    %v352 = vadd.f32 %v350, %v351
    %v353 = vmul.f32 %v334, %v218
    %v354 = vmul.f32 %v340, %v218
    %v355 = vmul.f32 %v346, %v218
    %v356 = vmul.f32 %v352, %v218
    %v361 = vsel %vm227, %v354, %v353
    %v362 = vsel %vm229, %v355, %v361
    %v363 = vsel %vm231, %v356, %v362
    %s365 = scalar_lea.vmem [#allocation3], %s77
    %366 = vst [vmem:[%s365] sm:$0xf] %v363
    %p367 = scmp.eq.s32.totalorder 0, 0
    // Predicated region
    $region38: #{tpu_custom_call.1} parent=1 // pred_check
      %p368 = pneg %p367
    $region39: #{tpu_custom_call.1} parent=1 // pred_check_branch
      %370 = sbr.rel (%p368) target = $region41
    $region40: #{tpu_custom_call.1} parent=1 // pred_region
      %v371 = vld [vmem:[#allocation4] sm:$0x1]
      %v372 = vld [vmem:[#allocation2] sm:$0xf]
      %v373 = vld [vmem:[#allocation3] sm:$0xf]
      %v374 = vmul.f32 %v372, %v372
      %vm375 = vcmask 1043456
      %v376 = vsel %vm375, %v374, 0.0
      %377 = vadd.xlane.f32.xlu0 %v376
      %v378 = vpop.xlane.xlu0 %377
      %v379 = vmax.f32 %v378, 1e-16
      %v380 = vrsqrt.pop %v379
      %v381 = vmul.f32 %v373, %v373
      %v382 = vsel %vm375, %v381, 0.0
      %383 = vadd.xlane.f32.xlu0 %v382
      %v384 = vpop.xlane.xlu0 %383
      %v385 = vmax.f32 %v384, 1e-16
      %v386 = vrsqrt.pop %v385
      %v387 = vmul.f32 %v372, %v380
      %v388 = vmul.f32 %v373, %v386
      %389 = vmatprep.subr.mxu0 0.0
      %390 = vmatpush1.xpose.msra.mxu0 0.0
      %391 = vmatprep.subr.mxu0 0.0
      %392 = vmatpush1.xpose.msra.mxu0 0.0
      %393 = vmatprep.subr.mxu0 0.0
      %394 = vmatpush1.xpose.msra.mxu0 0.0
      %395 = vmatprep.subr.mxu0 0.0
      %396 = vmatpush1.xpose.msra.mxu0 0.0
      %397 = vmatprep.subr.mxu0 0.0
      %398 = vmatpush1.xpose.msra.mxu0 0.0
      %399 = vmatprep.subr.mxu0 0.0
      %400 = vmatpush1.xpose.msra.mxu0 0.0
      %401 = vmatprep.subr.mxu0 0.0
      %402 = vmatpush1.xpose.msra.mxu0 0.0
      %403 = vmatprep.subr.mxu0 0.0
      %404 = vmatpush1.xpose.msra.mxu0 0.0
      %405 = vmatprep.subr.mxu0 0.0
      %406 = vmatpush1.xpose.msra.mxu0 0.0
      %407 = vmatprep.subr.mxu0 0.0
      %408 = vmatpush1.xpose.msra.mxu0 0.0
      %409 = vmatprep.subr.mxu0 0.0
      %410 = vmatpush1.xpose.msra.mxu0 0.0
      %411 = vmatprep.subr.mxu0 0.0
      %412 = vmatpush1.xpose.msra.mxu0 0.0
      %413 = vmatprep.subr.mxu0 0.0
      %414 = vmatpush1.xpose.msra.mxu0 0.0
      %415 = vmatprep.subr.mxu0 0.0
      %416 = vmatpush1.xpose.msra.mxu0 0.0
      %417 = vmatprep.subr.mxu0 0.0
      %418 = vmatpush1.xpose.msra.mxu0 0.0
      %419 = vmatprep.subr.mxu0 0.0
      %420 = vmatpush1.xpose.msra.mxu0 %v387
      %421 = vmatprep.subr.mxu0 0.0
      %422 = vmatpush2.xpose.msra.mxu0 0.0
      %423 = vmatprep.subr.mxu0 0.0
      %424 = vmatpush2.xpose.msra.mxu0 0.0
      %425 = vmatprep.subr.mxu0 0.0
      %426 = vmatpush2.xpose.msra.mxu0 0.0
      %427 = vmatprep.subr.mxu0 0.0
      %428 = vmatpush2.xpose.msra.mxu0 0.0
      %429 = vmatprep.subr.mxu0 0.0
      %430 = vmatpush2.xpose.msra.mxu0 0.0
      %431 = vmatprep.subr.mxu0 0.0
      %432 = vmatpush2.xpose.msra.mxu0 0.0
      %433 = vmatprep.subr.mxu0 0.0
      %434 = vmatpush2.xpose.msra.mxu0 0.0
      %435 = vmatprep.subr.mxu0 0.0
      %436 = vmatpush2.xpose.msra.mxu0 0.0
      %437 = vmatprep.subr.mxu0 0.0
      %438 = vmatpush2.xpose.msra.mxu0 0.0
      %439 = vmatprep.subr.mxu0 0.0
      %440 = vmatpush2.xpose.msra.mxu0 0.0
      %441 = vmatprep.subr.mxu0 0.0
      %442 = vmatpush2.xpose.msra.mxu0 0.0
      %443 = vmatprep.subr.mxu0 0.0
      %444 = vmatpush2.xpose.msra.mxu0 0.0
      %445 = vmatprep.subr.mxu0 0.0
      %446 = vmatpush2.xpose.msra.mxu0 0.0
      %447 = vmatprep.subr.mxu0 0.0
      %448 = vmatpush2.xpose.msra.mxu0 0.0
      %449 = vmatprep.subr.mxu0 0.0
      %450 = vmatpush2.xpose.msra.mxu0 0.0
      %451 = vmatprep.subr.mxu0 0.0
      %452 = vmatpush2.xpose.msra.mxu0 0.0
      %453 = vmatprep.mubr.f32.mxu0 0.0
      %454 = vmatmul.mubr.f32.gmra.mxu0 %v388
      %v455 = vpop.f32.mrf.mxu0
      %v456 = vadd.f32 0.0, %v455
      %v457 = vpop.f32.mrf.mxu0
      %458 = vdwg.mxu0
      %v459 = vlaneseq
      %v460 = vshrl.u32 %v459, 7
      %v461 = vlaneseq
      %v462 = vshrl.u32 %v461, 7
      %v463 = vsub.s32 0, %v462
      %v464 = vrot.slane %v371, %v463
      %vm465 = vcmp.eq.s32.totalorder %v460, %v464
      %v466 = vmul.f32 %v456, 20.0
      %vm467 = vcmask 27648
      %v468 = vsel %vm467, %v466, -inf
      %v469 = vrot.slane %v468, 4
      %v470 = vmax.f32 %v468, %v469
      %v471 = vrot.slane %v470, 2
      %v472 = vmax.f32 %v470, %v471
      %v473 = vrot.slane %v472, 1
      %v474 = vmax.f32 %v472, %v473
      %v475 = vsub.f32 %v466, %v474
      %v476 = vmul.f32 %v475, 1.442695
      %v477 = vpow.pop %v476
      %v478 = vsel %vm467, %v477, 0.0
      %v479 = vrot.slane %v478, 4
      %v480 = vadd.f32 %v478, %v479
      %v481 = vrot.slane %v480, 2
      %v482 = vadd.f32 %v480, %v481
      %v483 = vrot.slane %v482, 1
      %v484 = vadd.f32 %v482, %v483
      %v485 = vlog2.pop %v484
      %v486 = vmul.f32 %v485, 0.6931472
      %v487 = vadd.f32 %v486, %v474
      %v488 = vsel %vm465, %v466, 0.0
      %v489 = vsel %vm467, %v488, 0.0
      %v490 = vrot.slane %v489, 4
      %v491 = vadd.f32 %v489, %v490
      %v492 = vrot.slane %v491, 2
      %v493 = vadd.f32 %v491, %v492
      %v494 = vrot.slane %v493, 1
      %v495 = vadd.f32 %v493, %v494
      %v496 = vsub.f32 %v487, %v495
      %vm497 = vcmask 24576
      %v498 = vsel %vm497, %v496, 0.0
      %499 = vadd.xlane.f32.xlu0 %v498
      %v500 = vpop.xlane.xlu0 %499
      %v501 = vrot.slane %v500, 4
      %v502 = vadd.f32 %v500, %v501
      %v503 = vrot.slane %v502, 2
      %v504 = vadd.f32 %v502, %v503
      %v505 = vrot.slane %v504, 1
      %v506 = vadd.f32 %v504, %v505
      %s507 = vtos %v506
      %v508 = vrcp.pop 4.0
      %s509 = vtos %v508
      %s510 = smul.f32 %s507, %s509
      %v511 = vstv %s510
      %v512 = vsel %vm465, %v456, 0.0
      %v513 = vsel %vm467, %v512, 0.0
      %v514 = vrot.slane %v513, 4
      %v515 = vadd.f32 %v513, %v514
      %v516 = vrot.slane %v515, 2
      %v517 = vadd.f32 %v515, %v516
      %v518 = vrot.slane %v517, 1
      %v519 = vadd.f32 %v517, %v518
      %vm520 = vcmask 0
      %521 = vst.msk [vmem:[#allocation12] sm:$0x1] %vm520, %v511
      %522 = vst.msk [vmem:[#allocation13] sm:$0x1] %vm497, %v519
    $region41: #{tpu_custom_call.1} parent=1 // pred_fallthru
      _
    // Predicated region
    $region42: #{tpu_custom_call.1} parent=1 // pred_check
      _
    $region43: #{tpu_custom_call.1} parent=1 // pred_check_branch
      %524 = sbr.rel (0) target = $region45
    $region44: #{tpu_custom_call.1} parent=1 // pred_region
      %s526 = ssub.s32 16, 16
      %527 = vsyncadd [#allocation6], %s526
      %s529 = sshll.u32 [#allocation12], 4
      %s530 = int_to_ptr.vmem [resolvable:$true] %s529
      %532 = dma.vmem_to_hbm [thread:$0]  %s530, 16, %s5, [#allocation6]
    $region45: #{tpu_custom_call.1} parent=1 // pred_fallthru
      _
    // Predicated region
    $region46: #{tpu_custom_call.1} parent=1 // pred_check
      _
    $region47: #{tpu_custom_call.1} parent=1 // pred_check_branch
      %534 = sbr.rel (0) target = $region49
    $region48: #{tpu_custom_call.1} parent=1 // pred_region
      %s536 = ssub.s32 16, 16
      %537 = vsyncadd [#allocation14], %s536
      %s539 = sshll.u32 [#allocation13], 4
      %s540 = int_to_ptr.vmem [resolvable:$true] %s539
      %542 = dma.vmem_to_hbm [thread:$0]  %s540, 16, %s6, [#allocation14]
    $region49: #{tpu_custom_call.1} parent=1 // pred_fallthru
      _
    // Predicated region
    $region50: #{tpu_custom_call.1} parent=1 // pred_check
      _
    $region51: #{tpu_custom_call.1} parent=1 // pred_check_branch
      %544 = sbr.rel (0) target = $region53
    $region52: #{tpu_custom_call.1} parent=1 // pred_region
      %545 = dma.done [#allocation6], 16
    $region53: #{tpu_custom_call.1} parent=1 // pred_fallthru
      _
    // Predicated region
    $region54: #{tpu_custom_call.1} parent=1 // pred_check
      _
    $region55: #{tpu_custom_call.1} parent=1 // pred_check_branch
      %547 = sbr.rel (0) target = $region57
    $region56: #{tpu_custom_call.1} parent=1 // pred_region
      %548 = dma.done [#allocation14], 16
    $region57: #{tpu_custom_call.1} parent=1 // pred_fallthru
      _
    %549 = vsyncpa [#allocation5], 1
    %550 = vsyncpa [#allocation8], 1
    %551 = vsyncpa [#allocation11], 1
    %552 = vsyncpa [#allocation6], 1
    %553 = vsyncpa [#allocation14], 1

</llo_original>
